<compile_context>
chip_gen: v7x
topology: tpu7x:2x2x1
jax: 0.10.0
libtpu: 0.0.40
codegen_flags: <defaults>
</compile_context>

<pallas_src>
import functools

import jax
import jax.numpy as jnp
from jax.experimental import pallas as pl
from jax.experimental.pallas import tpu as pltpu

_LANES = 128
_SUBLANES = 8
_TILE_R = 1024  # 1024 x 128 x 4B = 512 KiB per f32 buffer; safe on v5e/v6e/v7x


def _keep_and_scale(r_i31, x, thresh, scale, out_dtype):
    """r_i31: int32 uniform over [0, 2^31). keep iff r > thresh (P ~= 1 - p)."""
    keep = r_i31 > thresh
    return jnp.where(keep, x.astype(jnp.float32) * scale, 0.0).astype(out_dtype)


def _dropout_kernel_tpu(seed_ref, x_ref, o_ref, *, thresh, scale):
    # Distinct PRNG stream per grid tile: seed + program_id.
    pltpu.prng_seed(seed_ref[0] + pl.program_id(0))
    bits = pltpu.bitcast(pltpu.prng_random_bits(x_ref.shape), jnp.int32)
    r = bits & jnp.int32(0x7FFFFFFF)  # uniform over [0, 2^31)
    o_ref[...] = _keep_and_scale(r, x_ref[...], thresh, scale, o_ref.dtype)


def _dropout_kernel_hostbits(r_ref, x_ref, o_ref, *, thresh, scale):
    # Fallback path: random int31 values are streamed in as a regular input.
    o_ref[...] = _keep_and_scale(r_ref[...], x_ref[...], thresh, scale, o_ref.dtype)


def dropout_forward(x, p, *, seed=0, on=True):
    """Pallas equivalent of dropout.forward (training mode when on=True)."""
    if not on:
        return x

    p = float(p)
    orig_shape = x.shape
    orig_dtype = x.dtype
    n = x.size

    rows = -(-n // _LANES)                       # ceil-div
    rows_p = -(-rows // _SUBLANES) * _SUBLANES   # pad rows up to multiple of 8
    padded = rows_p * _LANES

    x_flat = jnp.ravel(x)                        # keep original dtype
    if padded != n:
        # Only materialize padding when the flat size is not (8*128)-aligned.
        x_flat = jnp.pad(x_flat, (0, padded - n))
    x2d = x_flat.reshape(rows_p, _LANES)

    tile_r = min(_TILE_R, rows_p)
    num_tiles = -(-rows_p // tile_r)             # partial last block is fine

    # Integer keep-threshold and inverted-dropout scale (Python constants).
    thresh = min(int(p * (1 << 31)), (1 << 31) - 1)
    scale = (1.0 / (1.0 - p)) if p < 1.0 else 0.0   # p >= 1 -> all zeros

    if jax.default_backend() == "tpu":
        kernel = functools.partial(_dropout_kernel_tpu, thresh=thresh, scale=scale)
        seed_arr = jnp.asarray([seed], dtype=jnp.int32)
        out = pl.pallas_call(
            kernel,
            out_shape=jax.ShapeDtypeStruct((rows_p, _LANES), orig_dtype),
            grid_spec=pltpu.PrefetchScalarGridSpec(
                num_scalar_prefetch=1,           # seed lands in SMEM
                grid=(num_tiles,),
                in_specs=[
                    pl.BlockSpec((tile_r, _LANES), lambda i, seed_r: (i, 0)),
                ],
                out_specs=pl.BlockSpec((tile_r, _LANES), lambda i, seed_r: (i, 0)),
            ),
            compiler_params=pltpu.CompilerParams(
                dimension_semantics=("parallel",),
            ),
        )(seed_arr, x2d)
    else:
        # Non-TPU backend (e.g. CPU interpret): hardware PRNG primitives are
        # unavailable, so draw the random bits with jax.random and tile them
        # through the same elementwise kernel.
        bits = jax.random.bits(
            jax.random.PRNGKey(seed), (rows_p, _LANES), dtype=jnp.uint32
        )
        r31 = (bits & jnp.uint32(0x7FFFFFFF)).astype(jnp.int32)
        kernel = functools.partial(
            _dropout_kernel_hostbits, thresh=thresh, scale=scale
        )
        out = pl.pallas_call(
            kernel,
            out_shape=jax.ShapeDtypeStruct((rows_p, _LANES), orig_dtype),
            grid=(num_tiles,),
            in_specs=[
                pl.BlockSpec((tile_r, _LANES), lambda i: (i, 0)),
                pl.BlockSpec((tile_r, _LANES), lambda i: (i, 0)),
            ],
            out_specs=pl.BlockSpec((tile_r, _LANES), lambda i: (i, 0)),
        )(r31, x2d)

    out_flat = out.reshape(-1)
    if padded != n:
        out_flat = out_flat[:n]
    return out_flat.reshape(orig_shape)


if __name__ == "__main__":
    key = jax.random.PRNGKey(0)
    # Small NCHW-like input consistent with use on feature maps.
    x = jax.random.normal(key, (2, 4, 16, 16), dtype=jnp.float32)
    p = 0.5

    # Training mode (on=True): dropout applied inside the Pallas kernel.
    y_train = dropout_forward(x, p, seed=0, on=True)
    jax.block_until_ready(y_train)

    # Eval mode (on=False / turnoff()): identity.
    y_eval = dropout_forward(x, p, seed=0, on=False)
    jax.block_until_ready(y_eval)

    # Sanity checks: shape/dtype preserved; kept elements are x / (1 - p);
    # keep fraction is near 1 - p; eval is identity.
    assert y_train.shape == x.shape and y_train.dtype == x.dtype
    kept = jnp.abs(y_train) > 0
    scale_err = jnp.max(jnp.abs(jnp.where(kept, y_train - x / (1.0 - p), 0.0)))
    assert float(scale_err) < 1e-5
    keep_frac = float(jnp.mean(kept.astype(jnp.float32)))
    assert 0.2 < keep_frac < 0.8
    assert bool(jnp.allclose(y_eval, x))

    print("KERNEL_OK")
</pallas_src>

<mosaic_0001>
module attributes {stable_mosaic.version = 11 : i64} {
  func.func @_dropout_kernel_hostbits(%arg0: i32, %arg1: memref<16x128xi32, #tpu.memory_space<vmem>>, %arg2: memref<16x128xf32, #tpu.memory_space<vmem>>, %arg3: memref<16x128xf32, #tpu.memory_space<vmem>>) attributes {dimension_semantics = [#tpu.dimension_semantics<arbitrary>], iteration_bounds = array<i64: 1>, scalar_prefetch = 0 : i64, scratch_operands = 0 : i64, tpu.core_type = #tpu.core_type<tc>, window_params = [{transform_indices = @transform_0, window_bounds = array<i64: 16, 128>}, {transform_indices = @transform_1, window_bounds = array<i64: 16, 128>}, {transform_indices = @transform_2, window_bounds = array<i64: 16, 128>}]} {
    %c0 = arith.constant 0 : index
    %c0_0 = arith.constant 0 : index
    %0 = vector.load %arg1[%c0, %c0_0] : memref<16x128xi32, #tpu.memory_space<vmem>>, vector<16x128xi32>
    %c0_1 = arith.constant 0 : index
    %c0_2 = arith.constant 0 : index
    %1 = vector.load %arg2[%c0_1, %c0_2] : memref<16x128xf32, #tpu.memory_space<vmem>>, vector<16x128xf32>
    %c1073741824_i32 = arith.constant 1073741824 : i32
    %2 = vector.broadcast %c1073741824_i32 : i32 to vector<16x128xi32>
    %3 = arith.cmpi sgt, %0, %2 : vector<16x128xi32>
    %cst = arith.constant 2.000000e+00 : f32
    %4 = vector.broadcast %cst : f32 to vector<16x128xf32>
    %5 = arith.mulf %1, %4 : vector<16x128xf32>
    %cst_3 = arith.constant 0.000000e+00 : f32
    %6 = vector.broadcast %cst_3 : f32 to vector<16x128xf32>
    %7 = arith.select %3, %5, %6 : vector<16x128xi1>, vector<16x128xf32>
    %c0_4 = arith.constant 0 : index
    %c0_5 = arith.constant 0 : index
    %8 = vector.load %arg3[%c0_4, %c0_5] : memref<16x128xf32, #tpu.memory_space<vmem>>, vector<16x128xf32>
    tpu.vector_store %arg3[%c0_4, %c0_5], %7 {strides = array<i32>} : memref<16x128xf32, #tpu.memory_space<vmem>>, vector<16x128xf32>,
    return
  }
  func.func @transform_0(%arg0: i32) -> (i32, i32) {
    %c0_i32 = arith.constant 0 : i32
    %c0_i32_0 = arith.constant 0 : i32
    return %arg0, %c0_i32 : i32, i32
  }
  func.func @transform_1(%arg0: i32) -> (i32, i32) {
    %c0_i32 = arith.constant 0 : i32
    %c0_i32_0 = arith.constant 0 : i32
    return %arg0, %c0_i32 : i32, i32
  }
  func.func @transform_2(%arg0: i32) -> (i32, i32) {
    %c0_i32 = arith.constant 0 : i32
    %c0_i32_0 = arith.constant 0 : i32
    return %arg0, %c0_i32 : i32, i32
  }
}

</mosaic_0001>

<llo_original>
// kernel: tpu_custom_call.1
$region0: #{tpu_custom_call.1}
  #allocation0 [shape = 'u32[]', space=smem, size = 0x4, offset = 0x4, fixed_abs, tag = 'smem constant byte address 0x4 - core index']
  #allocation1 [shape = 'u32[144,128]{1,0:T(1,128)}', space=vmem, size = 0x12000, scoped, tag = 'internal scratch']
  %s0 = inlined_call_operand.hbm [shape: s32[16,128], index: 0, kind: input, shape index: {}]
  %s1 = inlined_call_operand.hbm [shape: f32[16,128], index: 1, kind: input, shape index: {}]
  %s2 = inlined_call_operand.hbm [shape: f32[16,128], index: 2, kind: output, shape index: {}]
  %s3 = sld [smem:[#allocation0]]
  $region26: #{tpu_custom_call.1} parent=0
    _
  %s5 = ssub.s32 1, %s3
  %s6 = scalar_select 0, %s5, %s3
  $region1: #{tpu_custom_call.1} parent=0
    #allocation2 [shape = 'u8[8192]{0}', space=vmem, size = 0x2000, scoped, tag = 'input window, operand 0, single buffered']
    #allocation3 [shape = 's32[1]{0}', space=sflag, size = 0x4, scoped, tag = 'scoped memory for tpu_custom_call.1']
    #allocation4 [shape = 's32[1]{0}', space=sflag, size = 0x4, scoped, tag = 'scoped memory for tpu_custom_call.1']
    #allocation5 [shape = 'u8[8192]{0}', space=vmem, size = 0x2000, scoped, tag = 'input window, operand 1, single buffered']
    #allocation6 [shape = 's32[1]{0}', space=sflag, size = 0x4, scoped, tag = 'scoped memory for tpu_custom_call.1']
    #allocation7 [shape = 'u8[8192]{0}', space=vmem, size = 0x2000, scoped, tag = 'output window, operand 0, single buffered']
    %7 = vsyncpa [#allocation3], 0
    %8 = vsyncpa [#allocation6], 0
    %9 = vsyncpa [#allocation4], 0
    // Predicated region
    $region2: #{tpu_custom_call.1} parent=1 // pred_check
      _
    $region3: #{tpu_custom_call.1} parent=1 // pred_check_branch
      %11 = sbr.rel (0) target = $region5
    $region4: #{tpu_custom_call.1} parent=1 // pred_region
      %s13 = ssub.s32 256, 256
      %14 = vsyncadd [#allocation3], %s13
      %s15 = sshll.u32 [#allocation2], 4
      %s16 = int_to_ptr.vmem [resolvable:$true] %s15
      %21 = dma.hbm_to_vmem [thread:$0]  %s0, 256, %s16, [#allocation3], 128, 128, 8
    $region5: #{tpu_custom_call.1} parent=1 // pred_fallthru
      _
    // Predicated region
    $region6: #{tpu_custom_call.1} parent=1 // pred_check
      _
    $region7: #{tpu_custom_call.1} parent=1 // pred_check_branch
      %23 = sbr.rel (0) target = $region9
    $region8: #{tpu_custom_call.1} parent=1 // pred_region
      %s25 = ssub.s32 256, 256
      %26 = vsyncadd [#allocation6], %s25
      %s27 = sshll.u32 [#allocation5], 4
      %s28 = int_to_ptr.vmem [resolvable:$true] %s27
      %33 = dma.hbm_to_vmem [thread:$0]  %s1, 256, %s28, [#allocation6], 128, 128, 8
    $region9: #{tpu_custom_call.1} parent=1 // pred_fallthru
      _
    // Predicated region
    $region10: #{tpu_custom_call.1} parent=1 // pred_check
      _
    $region11: #{tpu_custom_call.1} parent=1 // pred_check_branch
      %35 = sbr.rel (0) target = $region13
    $region12: #{tpu_custom_call.1} parent=1 // pred_region
      %36 = dma.done [#allocation3], 256
    $region13: #{tpu_custom_call.1} parent=1 // pred_fallthru
      _
    // Predicated region
    $region14: #{tpu_custom_call.1} parent=1 // pred_check
      _
    $region15: #{tpu_custom_call.1} parent=1 // pred_check_branch
      %38 = sbr.rel (0) target = $region17
    $region16: #{tpu_custom_call.1} parent=1 // pred_region
      %39 = dma.done [#allocation6], 256
    $region17: #{tpu_custom_call.1} parent=1 // pred_fallthru
      _
    %v40 = vld [vmem:[#allocation2] sm:$0xff]
    %v41 = vld [vmem:[#allocation2 + $0x8] sm:$0xff]
    %v42 = vld [vmem:[#allocation5] sm:$0xff]
    %v43 = vld [vmem:[#allocation5 + $0x8] sm:$0xff]
    %vm44 = vcmp.gt.s32.totalorder %v40, 1073741824
    %vm45 = vcmp.gt.s32.totalorder %v41, 1073741824
    %v46 = vmul.f32 %v42, 2.0
    %v47 = vmul.f32 %v43, 2.0
    %v48 = vsel %vm44, %v46, 0.0
    %v49 = vsel %vm45, %v47, 0.0
    %50 = vst [vmem:[#allocation7] sm:$0xff] %v48
    %51 = vst [vmem:[#allocation7 + $0x8] sm:$0xff] %v49
    // Predicated region
    $region18: #{tpu_custom_call.1} parent=1 // pred_check
      _
    $region19: #{tpu_custom_call.1} parent=1 // pred_check_branch
      %53 = sbr.rel (0) target = $region21
    $region20: #{tpu_custom_call.1} parent=1 // pred_region
      %s55 = ssub.s32 256, 256
      %56 = vsyncadd [#allocation4], %s55
      %s57 = sshll.u32 [#allocation7], 4
      %s58 = int_to_ptr.vmem [resolvable:$true] %s57
      %63 = dma.vmem_to_hbm [thread:$0]  %s58, 256, %s2, [#allocation4], 128, 128, 8
    $region21: #{tpu_custom_call.1} parent=1 // pred_fallthru
      _
    // Predicated region
    $region22: #{tpu_custom_call.1} parent=1 // pred_check
      _
    $region23: #{tpu_custom_call.1} parent=1 // pred_check_branch
      %65 = sbr.rel (0) target = $region25
    $region24: #{tpu_custom_call.1} parent=1 // pred_region
      %66 = dma.done [#allocation4], 256
    $region25: #{tpu_custom_call.1} parent=1 // pred_fallthru
      _
    %67 = vsyncpa [#allocation3], 1
    %68 = vsyncpa [#allocation6], 1
    %69 = vsyncpa [#allocation4], 1

</llo_original>
